<compile_context>
chip_gen: v7x
topology: tpu7x:2x2x1
jax: 0.10.0
libtpu: 0.0.40
codegen_flags: <defaults>
</compile_context>

<pallas_src>
import functools

import jax
import jax.numpy as jnp
from jax.experimental import pallas as pl
from jax.experimental.pallas import tpu as pltpu


def _round_up(x, m):
    return ((x + m - 1) // m) * m


# ----------------------------- tiled matmul (+bias, +ReLU) -----------------------------

def _matmul_bias_kernel(relu, a_ref, b_ref, bias_ref, o_ref, acc_ref):
    @pl.when(pl.program_id(2) == 0)
    def _():
        acc_ref[...] = jnp.zeros_like(acc_ref)

    acc_ref[...] += jnp.dot(a_ref[...], b_ref[...],
                            preferred_element_type=jnp.float32)

    @pl.when(pl.program_id(2) == pl.num_programs(2) - 1)
    def _():
        out = acc_ref[...] + bias_ref[...]
        if relu:
            out = jnp.maximum(out, 0.0)
        o_ref[...] = out.astype(o_ref.dtype)


def pallas_matmul(a, b, bias, relu=False, tm=256, tn=256, tk=512):
    """(M,K) @ (K,N) + bias, optional fused ReLU. bf16 operands, f32 accumulation.
    M/N/K are padded to tile multiples (N,K to 128) so outputs are lane-dense."""
    M, K = a.shape
    K2, N = b.shape
    assert K == K2
    tm = min(tm, _round_up(M, 16))
    tn = min(tn, _round_up(N, 128))
    tk = min(tk, _round_up(K, 128))
    Mp, Np, Kp = _round_up(M, tm), _round_up(N, tn), _round_up(K, tk)

    a_p = jnp.pad(a.astype(jnp.bfloat16), ((0, Mp - M), (0, Kp - K)))
    b_p = jnp.pad(b.astype(jnp.bfloat16), ((0, Kp - K), (0, Np - N)))
    bias_p = jnp.pad(bias.reshape(1, N).astype(jnp.float32), ((0, 0), (0, Np - N)))

    out = pl.pallas_call(
        functools.partial(_matmul_bias_kernel, relu),
        out_shape=jax.ShapeDtypeStruct((Mp, Np), jnp.float32),
        grid=(Mp // tm, Np // tn, Kp // tk),
        in_specs=[
            pl.BlockSpec((tm, tk), lambda i, j, k: (i, k)),
            pl.BlockSpec((tk, tn), lambda i, j, k: (k, j)),
            pl.BlockSpec((1, tn), lambda i, j, k: (0, j)),
        ],
        out_specs=pl.BlockSpec((tm, tn), lambda i, j, k: (i, j)),
        scratch_shapes=[pltpu.VMEM((tm, tn), jnp.float32)],
        compiler_params=pltpu.CompilerParams(
            dimension_semantics=("parallel", "parallel", "arbitrary")),
    )(a_p, b_p, bias_p)
    return out[:M, :N]


# ----------------------------- max pool 3x3, stride=down_sample -----------------------------

def _maxpool_kernel(win_ref, o_ref):
    acc = win_ref[0:1, :]
    for i in range(1, 9):
        acc = jnp.maximum(acc, win_ref[i:i + 1, :])
    o_ref[...] = acc


def pallas_maxpool_3x3(x, stride):
    """nn.MaxPool2d(kernel_size=3, stride=stride, padding=1) — implicit -inf padding.
    Window gathering is XLA glue; the 9-way max reduction runs in a lane-tiled Pallas kernel."""
    B, C, H, W = x.shape
    Ho = (H - 1) // stride + 1
    Wo = (W - 1) // stride + 1
    xp = jnp.pad(x, ((0, 0), (0, 0), (1, 1), (1, 1)), constant_values=-jnp.inf)
    wins = [xp[:, :, dh:dh + stride * (Ho - 1) + 1:stride,
               dw:dw + stride * (Wo - 1) + 1:stride]
            for dh in range(3) for dw in range(3)]
    N = B * C * Ho * Wo
    win = jnp.stack(wins, axis=0).reshape(9, N)

    tl = min(4096, _round_up(N, 128))
    Np = _round_up(N, tl)
    win_p = jnp.pad(win, ((0, 0), (0, Np - N)))

    out = pl.pallas_call(
        _maxpool_kernel,
        out_shape=jax.ShapeDtypeStruct((1, Np), jnp.float32),
        grid=(Np // tl,),
        in_specs=[pl.BlockSpec((9, tl), lambda i: (0, i))],
        out_specs=pl.BlockSpec((1, tl), lambda i: (0, i)),
        compiler_params=pltpu.CompilerParams(dimension_semantics=("parallel",)),
    )(win_p)
    return out.reshape(-1)[:N].reshape(B, C, Ho, Wo)


# ----------------------------- layer norm (row tiled) -----------------------------

def _layernorm_kernel(x_ref, g_ref, b_ref, o_ref):
    x = x_ref[...]
    mean = jnp.mean(x, axis=-1, keepdims=True)
    var = jnp.mean((x - mean) ** 2, axis=-1, keepdims=True)
    o_ref[...] = (x - mean) * jax.lax.rsqrt(var + 1e-5) * g_ref[...] + b_ref[...]


def pallas_layernorm(x2d, gamma, beta, tm=512):
    M, D = x2d.shape
    tm = min(tm, _round_up(M, 8))
    Mp = _round_up(M, tm)
    x_p = jnp.pad(x2d, ((0, Mp - M), (0, 0)))
    out = pl.pallas_call(
        _layernorm_kernel,
        out_shape=jax.ShapeDtypeStruct((Mp, D), jnp.float32),
        grid=(Mp // tm,),
        in_specs=[pl.BlockSpec((tm, D), lambda i: (i, 0)),
                  pl.BlockSpec((1, D), lambda i: (0, 0)),
                  pl.BlockSpec((1, D), lambda i: (0, 0))],
        out_specs=pl.BlockSpec((tm, D), lambda i: (i, 0)),
        compiler_params=pltpu.CompilerParams(dimension_semantics=("parallel",)),
    )(x_p, gamma.reshape(1, D), beta.reshape(1, D))
    return out[:M]


# ----------------------------- bidirectional LSTM recurrence -----------------------------

def _make_bilstm_kernel(T, B, H):
    def step(gates_x, h, c, wh_ref):
        # gates_x already contains x_t @ Wi + b_ih + b_hh (hoisted big matmul).
        gates = gates_x + jnp.dot(h.astype(jnp.bfloat16), wh_ref[...],
                                  preferred_element_type=jnp.float32)
        i_g = jax.nn.sigmoid(gates[:, 0 * H:1 * H])     # PyTorch gate order: i, f, g, o
        f_g = jax.nn.sigmoid(gates[:, 1 * H:2 * H])
        g_g = jnp.tanh(gates[:, 2 * H:3 * H])
        o_g = jax.nn.sigmoid(gates[:, 3 * H:4 * H])
        c_new = f_g * c + i_g * g_g
        h_new = o_g * jnp.tanh(c_new)
        return h_new, c_new

    def kernel(gx_ref, whf_ref, whb_ref, o_ref, hf, cf, hb, cb):
        zero = jnp.zeros((B, H), jnp.float32)
        hf[...] = zero
        cf[...] = zero
        hb[...] = zero
        cb[...] = zero

        def body(t, carry):
            # forward direction (time t)
            gx_t = gx_ref[t]                            # (B, 8H), fwd gates in [:4H]
            hf_new, cf_new = step(gx_t[:, :4 * H], hf[...], cf[...], whf_ref)
            hf[...] = hf_new
            cf[...] = cf_new
            o_ref[t, :, :H] = hf_new
            # backward direction (time T-1-t)
            tb = T - 1 - t
            gx_tb = gx_ref[tb]                          # bwd gates in [4H:]
            hb_new, cb_new = step(gx_tb[:, 4 * H:], hb[...], cb[...], whb_ref)
            hb[...] = hb_new
            cb[...] = cb_new
            o_ref[tb, :, H:] = hb_new
            return carry

        jax.lax.fori_loop(0, T, body, 0)

    return kernel


def pallas_bilstm(x, wif, whf, bf, wib, whb, bb, H):
    """x: (T, B, D).  Returns (T, B, 2H) = [forward | backward] hidden states."""
    T, B, D = x.shape
    # Hoisted input projection for both directions: one big MXU matmul (biases fused).
    wi_cat = jnp.concatenate([wif, wib], axis=1)                       # (D, 8H)
    b_cat = jnp.concatenate([bf.reshape(1, -1), bb.reshape(1, -1)], axis=1)  # (1, 8H)
    gx = pallas_matmul(x.reshape(T * B, D), wi_cat, b_cat, relu=False)  # (T*B, 8H) f32
    gx = gx.reshape(T, B, 8 * H)

    kernel = _make_bilstm_kernel(T, B, H)
    out = pl.pallas_call(
        kernel,
        out_shape=jax.ShapeDtypeStruct((T, B, 2 * H), jnp.float32),
        grid=(1,),
        in_specs=[
            pl.BlockSpec((T, B, 8 * H), lambda i: (0, 0, 0)),
            pl.BlockSpec((H, 4 * H), lambda i: (0, 0)),
            pl.BlockSpec((H, 4 * H), lambda i: (0, 0)),
        ],
        out_specs=pl.BlockSpec((T, B, 2 * H), lambda i: (0, 0, 0)),
        scratch_shapes=[pltpu.VMEM((B, H), jnp.float32)] * 4,
        compiler_params=pltpu.CompilerParams(dimension_semantics=("arbitrary",)),
    )(gx, whf.astype(jnp.bfloat16), whb.astype(jnp.bfloat16))
    return out


# ----------------------------- fused dense head: Linear -> ReLU -> Linear -----------------------------

def _dense_head_kernel(x_ref, w1_ref, b1_ref, w2_ref, b2_ref, o_ref):
    h = jnp.dot(x_ref[...], w1_ref[...], preferred_element_type=jnp.float32)
    h = jnp.maximum(h + b1_ref[...], 0.0)
    o = jnp.dot(h.astype(jnp.bfloat16), w2_ref[...], preferred_element_type=jnp.float32)
    o_ref[...] = o + b2_ref[...]


def pallas_dense_head(x2d, w1, b1, w2, b2, tm=512):
    """x2d (M, D) -> ReLU(x@w1+b1) @ w2 + b2, intermediate never leaves the kernel."""
    M, D = x2d.shape
    H = w1.shape[1]
    C = w2.shape[1]
    tm = min(tm, _round_up(M, 16))
    Mp = _round_up(M, tm)
    Hp = _round_up(H, 128)
    Cp = _round_up(C, 128)

    x_p = jnp.pad(x2d.astype(jnp.bfloat16), ((0, Mp - M), (0, 0)))
    w1_p = jnp.pad(w1.astype(jnp.bfloat16), ((0, 0), (0, Hp - H)))
    b1_p = jnp.pad(b1.reshape(1, H).astype(jnp.float32), ((0, 0), (0, Hp - H)))
    w2_p = jnp.pad(w2.astype(jnp.bfloat16), ((0, Hp - H), (0, Cp - C)))
    b2_p = jnp.pad(b2.reshape(1, C).astype(jnp.float32), ((0, 0), (0, Cp - C)))

    out = pl.pallas_call(
        _dense_head_kernel,
        out_shape=jax.ShapeDtypeStruct((Mp, Cp), jnp.float32),
        grid=(Mp // tm,),
        in_specs=[pl.BlockSpec((tm, D), lambda i: (i, 0)),
                  pl.BlockSpec((D, Hp), lambda i: (0, 0)),
                  pl.BlockSpec((1, Hp), lambda i: (0, 0)),
                  pl.BlockSpec((Hp, Cp), lambda i: (0, 0)),
                  pl.BlockSpec((1, Cp), lambda i: (0, 0))],
        out_specs=pl.BlockSpec((tm, Cp), lambda i: (i, 0)),
        compiler_params=pltpu.CompilerParams(dimension_semantics=("parallel",)),
    )(x_p, w1_p, b1_p, w2_p, b2_p)
    return out[:M, :C]


# ----------------------------- glue (plain JAX) -----------------------------

def _im2col(x, k):
    B, C, H, W = x.shape
    p = k // 2
    xp = jnp.pad(x, ((0, 0), (0, 0), (p, p), (p, p)))
    cols = []
    for dh in range(k):
        for dw in range(k):
            cols.append(xp[:, :, dh:dh + H, dw:dw + W])
    patches = jnp.stack(cols, axis=2)            # (B, C, k*k, H, W)
    return patches.reshape(B, C * k * k, H * W)  # matches weight.reshape(Cout, Cin*k*k)


def conv2d_same_relu(x, weight, bias):
    """Conv2d(stride=1, padding=k//2) + ReLU via im2col + tiled Pallas matmul."""
    B, Cin, H, W = x.shape
    Cout, _, k, _ = weight.shape
    K = Cin * k * k
    patches = _im2col(x, k)                               # (B, K, H*W)
    A = patches.transpose(0, 2, 1).reshape(B * H * W, K)  # (M, K)
    Wm = weight.reshape(Cout, K).T                        # (K, Cout)
    out = pallas_matmul(A, Wm, bias, relu=True)           # (B*H*W, Cout)
    return out.reshape(B, H, W, Cout).transpose(0, 3, 1, 2)


def crnn_lyrics_forward(x, params):
    """x: (B, 1, F, T) NCHW.  Returns (T', B, num_classes) like the PyTorch module."""
    h = x.astype(jnp.float32)

    # ConvNN
    for (w, b) in params['convs']:
        h = conv2d_same_relu(h, w, b)

    # MaxPool2d(3, stride=down_sample, padding=1)
    h = pallas_maxpool_3x3(h, params['down_sample'])

    # reshape (B, C, H', W') -> (B, C*H', W') -> permute -> (W', B, C*H')
    B_, C_, Ho, Wo = h.shape
    h = h.reshape(B_, C_ * Ho, Wo)
    h = jnp.transpose(h, (2, 0, 1))

    # RNN stack (bidirectional LSTMs, LayerNorm on input for layers i > 0)
    for layer in params['rnn']:
        Tn, Bn, Dn = h.shape
        if layer['normalize']:
            flat = pallas_layernorm(h.reshape(Tn * Bn, Dn),
                                    layer['ln_gamma'], layer['ln_beta'])
            h = flat.reshape(Tn, Bn, Dn)
        h = pallas_bilstm(h, layer['wif'], layer['whf'], layer['bf'],
                          layer['wib'], layer['whb'], layer['bb'],
                          layer['hidden'])

    # Dense head: Linear -> ReLU -> Linear, fused in one kernel.
    Tn, Bn, Dn = h.shape
    flat = pallas_dense_head(h.reshape(Tn * Bn, Dn),
                             params['w1'].T, params['b1'],
                             params['w2'].T, params['b2'])
    return flat.reshape(Tn, Bn, -1)


def init_params(key, *, input_channels, conv_channels, kernel_sizes,
                input_features, down_sample, num_lstms, lstm_channels,
                num_classes):
    keys = jax.random.split(key, 64)
    it = iter(range(64))

    def nk():
        return keys[next(it)]

    convs = []
    cin = input_channels
    for cout, k in zip(conv_channels, kernel_sizes):
        w = 0.1 * jax.random.normal(nk(), (cout, cin, k, k), jnp.float32)
        b = 0.1 * jax.random.normal(nk(), (cout,), jnp.float32)
        convs.append((w, b))
        cin = cout

    feat = conv_channels[-1] * ((input_features - 1) // down_sample + 1)
    rnn = []
    H = lstm_channels
    d = feat
    for i in range(num_lstms):
        layer = dict(hidden=H, normalize=(i > 0))
        if i > 0:
            layer['ln_gamma'] = jnp.ones((d,), jnp.float32)
            layer['ln_beta'] = jnp.zeros((d,), jnp.float32)
        for tag in ('f', 'b'):
            wih = 0.1 * jax.random.normal(nk(), (4 * H, d), jnp.float32)
            whh = 0.1 * jax.random.normal(nk(), (4 * H, H), jnp.float32)
            bih = 0.1 * jax.random.normal(nk(), (4 * H,), jnp.float32)
            bhh = 0.1 * jax.random.normal(nk(), (4 * H,), jnp.float32)
            layer['wi' + tag] = wih.T                      # (d, 4H) pre-transposed
            layer['wh' + tag] = whh.T                      # (H, 4H)
            layer['b' + tag] = (bih + bhh).reshape(1, 4 * H)
        rnn.append(layer)
        d = 2 * H

    w1 = 0.1 * jax.random.normal(nk(), (lstm_channels, 2 * lstm_channels), jnp.float32)
    b1 = 0.1 * jax.random.normal(nk(), (lstm_channels,), jnp.float32)
    w2 = 0.1 * jax.random.normal(nk(), (num_classes, lstm_channels), jnp.float32)
    b2 = 0.1 * jax.random.normal(nk(), (num_classes,), jnp.float32)

    return dict(convs=convs, rnn=rnn, w1=w1, b1=b1, w2=w2, b2=b2,
                down_sample=down_sample)


if __name__ == "__main__":
    # Small, self-consistent config (scaled-down CRNN_lyrics defaults).
    B, F, T = 2, 16, 8
    cfg = dict(input_channels=1, conv_channels=[8, 8], kernel_sizes=[3, 3],
               input_features=F, down_sample=2, num_lstms=2,
               lstm_channels=16, num_classes=10)

    key = jax.random.PRNGKey(0)
    kx, kp = jax.random.split(key)
    x = jax.random.normal(kx, (B, 1, F, T), jnp.float32)   # NCHW, F == input_features
    params = init_params(kp, **cfg)

    out = crnn_lyrics_forward(x, params)
    out = jax.block_until_ready(out)

    T_out = (T - 1) // cfg['down_sample'] + 1
    assert out.shape == (T_out, B, cfg['num_classes']), out.shape
    assert bool(jnp.all(jnp.isfinite(out)))
    print("KERNEL_OK")
</pallas_src>

<mosaic_0001>
module attributes {stable_mosaic.version = 11 : i64} {
  func.func @_matmul_bias_kernel(%arg0: i32, %arg1: i32, %arg2: i32, %arg3: memref<256x128xbf16, #tpu.memory_space<vmem>>, %arg4: memref<128x128xbf16, #tpu.memory_space<vmem>>, %arg5: memref<1x128xf32, #tpu.memory_space<vmem>>, %arg6: memref<256x128xf32, #tpu.memory_space<vmem>>, %arg7: memref<256x128xf32, #tpu.memory_space<vmem>>) attributes {dimension_semantics = [#tpu.dimension_semantics<parallel>, #tpu.dimension_semantics<parallel>, #tpu.dimension_semantics<arbitrary>], iteration_bounds = array<i64: 1, 1, 1>, scalar_prefetch = 0 : i64, scratch_operands = 1 : i64, tpu.core_type = #tpu.core_type<tc>, window_params = [{transform_indices = @transform_0, window_bounds = array<i64: 256, 128>}, {transform_indices = @transform_1, window_bounds = array<i64: 128, 128>}, {transform_indices = @transform_2, window_bounds = array<i64: 1, 128>}, {transform_indices = @transform_3, window_bounds = array<i64: 256, 128>}]} {
    %c0_i32 = arith.constant 0 : i32
    %0 = arith.cmpi eq, %arg2, %c0_i32 : i32
    %1 = arith.extui %0 : i1 to i32
    %c0_i32_0 = arith.constant 0 : i32
    %2 = arith.cmpi ne, %1, %c0_i32_0 : i32
    scf.if %2 {
      %cst_10 = arith.constant 0.000000e+00 : f32
      %12 = vector.broadcast %cst_10 : f32 to vector<256x128xf32>
      %c0_11 = arith.constant 0 : index
      %c0_12 = arith.constant 0 : index
      %13 = vector.load %arg7[%c0_11, %c0_12] : memref<256x128xf32, #tpu.memory_space<vmem>>, vector<256x128xf32>
      tpu.vector_store %arg7[%c0_11, %c0_12], %12 {strides = array<i32>} : memref<256x128xf32, #tpu.memory_space<vmem>>, vector<256x128xf32>,
    } else {
    }
    %c0 = arith.constant 0 : index
    %c0_1 = arith.constant 0 : index
    %3 = vector.load %arg7[%c0, %c0_1] : memref<256x128xf32, #tpu.memory_space<vmem>>, vector<256x128xf32>
    %c0_2 = arith.constant 0 : index
    %c0_3 = arith.constant 0 : index
    %4 = vector.load %arg3[%c0_2, %c0_3] : memref<256x128xbf16, #tpu.memory_space<vmem>>, vector<256x128xbf16>
    %c0_4 = arith.constant 0 : index
    %c0_5 = arith.constant 0 : index
    %5 = vector.load %arg4[%c0_4, %c0_5] : memref<128x128xbf16, #tpu.memory_space<vmem>>, vector<128x128xbf16>
    %cst = arith.constant dense<0.000000e+00> : vector<256x128xf32>
    %6 = tpu.matmul %4, %5, %cst {dimension_numbers = #tpu.dot_dimension_numbers<[1], [0], [0], [1], [0, 0, 1, 1], [], []>} : vector<256x128xbf16>, vector<128x128xbf16>, vector<256x128xf32> -> vector<256x128xf32>
    %7 = arith.addf %3, %6 : vector<256x128xf32>
    %c0_6 = arith.constant 0 : index
    %c0_7 = arith.constant 0 : index
    %8 = vector.load %arg7[%c0_6, %c0_7] : memref<256x128xf32, #tpu.memory_space<vmem>>, vector<256x128xf32>
    tpu.vector_store %arg7[%c0_6, %c0_7], %7 {strides = array<i32>} : memref<256x128xf32, #tpu.memory_space<vmem>>, vector<256x128xf32>,
    %c0_i32_8 = arith.constant 0 : i32
    %9 = arith.cmpi eq, %arg2, %c0_i32_8 : i32
    %10 = arith.extui %9 : i1 to i32
    %c0_i32_9 = arith.constant 0 : i32
    %11 = arith.cmpi ne, %10, %c0_i32_9 : i32
    scf.if %11 {
      %c0_10 = arith.constant 0 : index
      %c0_11 = arith.constant 0 : index
      %12 = vector.load %arg7[%c0_10, %c0_11] : memref<256x128xf32, #tpu.memory_space<vmem>>, vector<256x128xf32>
      %c0_12 = arith.constant 0 : index
      %c0_13 = arith.constant 0 : index
      %13 = vector.load %arg5[%c0_12, %c0_13] : memref<1x128xf32, #tpu.memory_space<vmem>>, vector<1x128xf32>
      %14 = vector.broadcast %13 : vector<1x128xf32> to vector<256x128xf32>
      %15 = arith.addf %12, %14 : vector<256x128xf32>
      %cst_14 = arith.constant 0.000000e+00 : f32
      %16 = vector.broadcast %cst_14 : f32 to vector<256x128xf32>
      %17 = arith.maximumf %15, %16 : vector<256x128xf32>
      %c0_15 = arith.constant 0 : index
      %c0_16 = arith.constant 0 : index
      %18 = vector.load %arg6[%c0_15, %c0_16] : memref<256x128xf32, #tpu.memory_space<vmem>>, vector<256x128xf32>
      tpu.vector_store %arg6[%c0_15, %c0_16], %17 {strides = array<i32>} : memref<256x128xf32, #tpu.memory_space<vmem>>, vector<256x128xf32>,
    } else {
    }
    return
  }
  func.func @transform_0(%arg0: i32, %arg1: i32, %arg2: i32) -> (i32, i32) {
    %c0_i32 = arith.constant 0 : i32
    return %arg0, %arg2 : i32, i32
  }
  func.func @transform_1(%arg0: i32, %arg1: i32, %arg2: i32) -> (i32, i32) {
    %c0_i32 = arith.constant 0 : i32
    return %arg2, %arg1 : i32, i32
  }
  func.func @transform_2(%arg0: i32, %arg1: i32, %arg2: i32) -> (i32, i32) {
    %c0_i32 = arith.constant 0 : i32
    %c0_i32_0 = arith.constant 0 : i32
    return %c0_i32, %arg1 : i32, i32
  }
  func.func @transform_3(%arg0: i32, %arg1: i32, %arg2: i32) -> (i32, i32) {
    %c0_i32 = arith.constant 0 : i32
    return %arg0, %arg1 : i32, i32
  }
}

</mosaic_0001>

<llo_original>
// kernel: tpu_custom_call.1
$region0: #{tpu_custom_call.1}
  #allocation0 [shape = 'u32[]', space=smem, size = 0x4, offset = 0x4, fixed_abs, tag = 'smem constant byte address 0x4 - core index']
  #allocation1 [shape = 'u32[144,128]{1,0:T(1,128)}', space=vmem, size = 0x12000, scoped, tag = 'internal scratch']
  #allocation2 [shape = 'f32[256,128]{1,0:T(8,128)}', space=vmem, size = 0x20000, scoped, tag = 'scratch operand']
  %s0 = inlined_call_operand.hbm [shape: bf16[256,128], index: 0, kind: input, shape index: {}]
  %s1 = inlined_call_operand.hbm [shape: bf16[128,128], index: 1, kind: input, shape index: {}]
  %s2 = inlined_call_operand.vmem [shape: f32[1,128], index: 2, kind: input, shape index: {}]
  %s3 = inlined_call_operand.hbm [shape: f32[256,128], index: 3, kind: output, shape index: {}]
  %s4 = sld [smem:[#allocation0]]
  $region38: #{tpu_custom_call.1} parent=0
    _
  %s6 = ssub.s32 1, %s4
  %s7 = scalar_select 0, %s6, %s4
  $region1: #{tpu_custom_call.1} parent=0
    #allocation3 [shape = 'u8[65536]{0}', space=vmem, size = 0x10000, scoped, tag = 'input window, operand 0, single buffered']
    #allocation4 [shape = 's32[1]{0}', space=sflag, size = 0x4, scoped, tag = 'scoped memory for tpu_custom_call.1']
    #allocation5 [shape = 's32[1]{0}', space=sflag, size = 0x4, scoped, tag = 'scoped memory for tpu_custom_call.1']
    #allocation6 [shape = 'u8[32768]{0}', space=vmem, size = 0x8000, scoped, tag = 'input window, operand 1, single buffered']
    #allocation7 [shape = 's32[1]{0}', space=sflag, size = 0x4, scoped, tag = 'scoped memory for tpu_custom_call.1']
    #allocation8 [shape = 'u8[131072]{0}', space=vmem, size = 0x20000, scoped, tag = 'output window, operand 0, single buffered']
    %8 = vsyncpa [#allocation4], 0
    %9 = vsyncpa [#allocation7], 0
    %10 = vsyncpa [#allocation5], 0
    // Predicated region
    $region2: #{tpu_custom_call.1} parent=1 // pred_check
      _
    $region3: #{tpu_custom_call.1} parent=1 // pred_check_branch
      %12 = sbr.rel (0) target = $region5
    $region4: #{tpu_custom_call.1} parent=1 // pred_region
      %s14 = ssub.s32 2048, 2048
      %15 = vsyncadd [#allocation4], %s14
      %s16 = sshll.u32 [#allocation3], 4
      %s17 = int_to_ptr.vmem [resolvable:$true] %s16
      %22 = dma.hbm_to_vmem [thread:$0]  %s0, 2048, %s17, [#allocation4], 64, 64, 4
    $region5: #{tpu_custom_call.1} parent=1 // pred_fallthru
      _
    // Predicated region
    $region6: #{tpu_custom_call.1} parent=1 // pred_check
      _
    $region7: #{tpu_custom_call.1} parent=1 // pred_check_branch
      %24 = sbr.rel (0) target = $region9
    $region8: #{tpu_custom_call.1} parent=1 // pred_region
      %s26 = ssub.s32 1024, 1024
      %27 = vsyncadd [#allocation7], %s26
      %s28 = sshll.u32 [#allocation6], 4
      %s29 = int_to_ptr.vmem [resolvable:$true] %s28
      %34 = dma.hbm_to_vmem [thread:$0]  %s1, 1024, %s29, [#allocation7], 64, 64, 4
    $region9: #{tpu_custom_call.1} parent=1 // pred_fallthru
      _
    // Predicated region
    $region10: #{tpu_custom_call.1} parent=1 // pred_check
      _
    $region11: #{tpu_custom_call.1} parent=1 // pred_check_branch
      %36 = sbr.rel (0) target = $region13
    $region12: #{tpu_custom_call.1} parent=1 // pred_region
      _
    $region13: #{tpu_custom_call.1} parent=1 // pred_fallthru
      _
    // Predicated region
    $region14: #{tpu_custom_call.1} parent=1 // pred_check
      _
    $region15: #{tpu_custom_call.1} parent=1 // pred_check_branch
      %38 = sbr.rel (0) target = $region17
    $region16: #{tpu_custom_call.1} parent=1 // pred_region
      %39 = dma.done [#allocation4], 2048
    $region17: #{tpu_custom_call.1} parent=1 // pred_fallthru
      _
    // Predicated region
    $region18: #{tpu_custom_call.1} parent=1 // pred_check
      _
    $region19: #{tpu_custom_call.1} parent=1 // pred_check_branch
      %41 = sbr.rel (0) target = $region21
    $region20: #{tpu_custom_call.1} parent=1 // pred_region
      %42 = dma.done [#allocation7], 1024
    $region21: #{tpu_custom_call.1} parent=1 // pred_fallthru
      _
    %p44 = scmp.eq.s32.totalorder 0, 0
    // Predicated region
    $region22: #{tpu_custom_call.1} parent=1 // pred_check
      %p45 = pneg %p44
    $region23: #{tpu_custom_call.1} parent=1 // pred_check_branch
      %47 = sbr.rel (%p45) target = $region25
    $region24: #{tpu_custom_call.1} parent=1 // pred_region
      %48 = vst [vmem:[#allocation2] sm:$0xff] 0.0
      %49 = vst [vmem:[#allocation2 + $0x8] sm:$0xff] 0.0
      %50 = vst [vmem:[#allocation2 + $0x10] sm:$0xff] 0.0
      %51 = vst [vmem:[#allocation2 + $0x18] sm:$0xff] 0.0
      %52 = vst [vmem:[#allocation2 + $0x20] sm:$0xff] 0.0
      %53 = vst [vmem:[#allocation2 + $0x28] sm:$0xff] 0.0
      %54 = vst [vmem:[#allocation2 + $0x30] sm:$0xff] 0.0
      %55 = vst [vmem:[#allocation2 + $0x38] sm:$0xff] 0.0
      %56 = vst [vmem:[#allocation2 + $0x40] sm:$0xff] 0.0
      %57 = vst [vmem:[#allocation2 + $0x48] sm:$0xff] 0.0
      %58 = vst [vmem:[#allocation2 + $0x50] sm:$0xff] 0.0
      %59 = vst [vmem:[#allocation2 + $0x58] sm:$0xff] 0.0
      %60 = vst [vmem:[#allocation2 + $0x60] sm:$0xff] 0.0
      %61 = vst [vmem:[#allocation2 + $0x68] sm:$0xff] 0.0
      %62 = vst [vmem:[#allocation2 + $0x70] sm:$0xff] 0.0
      %63 = vst [vmem:[#allocation2 + $0x78] sm:$0xff] 0.0
      %64 = vst [vmem:[#allocation2 + $0x80] sm:$0xff] 0.0
      %65 = vst [vmem:[#allocation2 + $0x88] sm:$0xff] 0.0
      %66 = vst [vmem:[#allocation2 + $0x90] sm:$0xff] 0.0
      %67 = vst [vmem:[#allocation2 + $0x98] sm:$0xff] 0.0
      %68 = vst [vmem:[#allocation2 + $0xa0] sm:$0xff] 0.0
      %69 = vst [vmem:[#allocation2 + $0xa8] sm:$0xff] 0.0
      %70 = vst [vmem:[#allocation2 + $0xb0] sm:$0xff] 0.0
      %71 = vst [vmem:[#allocation2 + $0xb8] sm:$0xff] 0.0
      %72 = vst [vmem:[#allocation2 + $0xc0] sm:$0xff] 0.0
      %73 = vst [vmem:[#allocation2 + $0xc8] sm:$0xff] 0.0
      %74 = vst [vmem:[#allocation2 + $0xd0] sm:$0xff] 0.0
      %75 = vst [vmem:[#allocation2 + $0xd8] sm:$0xff] 0.0
      %76 = vst [vmem:[#allocation2 + $0xe0] sm:$0xff] 0.0
      %77 = vst [vmem:[#allocation2 + $0xe8] sm:$0xff] 0.0
      %78 = vst [vmem:[#allocation2 + $0xf0] sm:$0xff] 0.0
      %79 = vst [vmem:[#allocation2 + $0xf8] sm:$0xff] 0.0
    $region25: #{tpu_custom_call.1} parent=1 // pred_fallthru
      _
    %v80 = vld [vmem:[#allocation2] sm:$0xff]
    %v81 = vld [vmem:[#allocation2 + $0x8] sm:$0xff]
    %v82 = vld [vmem:[#allocation2 + $0x10] sm:$0xff]
    %v83 = vld [vmem:[#allocation2 + $0x18] sm:$0xff]
    %v84 = vld [vmem:[#allocation2 + $0x20] sm:$0xff]
    %v85 = vld [vmem:[#allocation2 + $0x28] sm:$0xff]
    %v86 = vld [vmem:[#allocation2 + $0x30] sm:$0xff]
    %v87 = vld [vmem:[#allocation2 + $0x38] sm:$0xff]
    %v88 = vld [vmem:[#allocation2 + $0x40] sm:$0xff]
    %v89 = vld [vmem:[#allocation2 + $0x48] sm:$0xff]
    %v90 = vld [vmem:[#allocation2 + $0x50] sm:$0xff]
    %v91 = vld [vmem:[#allocation2 + $0x58] sm:$0xff]
    %v92 = vld [vmem:[#allocation2 + $0x60] sm:$0xff]
    %v93 = vld [vmem:[#allocation2 + $0x68] sm:$0xff]
    %v94 = vld [vmem:[#allocation2 + $0x70] sm:$0xff]
    %v95 = vld [vmem:[#allocation2 + $0x78] sm:$0xff]
    %v96 = vld [vmem:[#allocation2 + $0x80] sm:$0xff]
    %v97 = vld [vmem:[#allocation2 + $0x88] sm:$0xff]
    %v98 = vld [vmem:[#allocation2 + $0x90] sm:$0xff]
    %v99 = vld [vmem:[#allocation2 + $0x98] sm:$0xff]
    %v100 = vld [vmem:[#allocation2 + $0xa0] sm:$0xff]
    %v101 = vld [vmem:[#allocation2 + $0xa8] sm:$0xff]
    %v102 = vld [vmem:[#allocation2 + $0xb0] sm:$0xff]
    %v103 = vld [vmem:[#allocation2 + $0xb8] sm:$0xff]
    %v104 = vld [vmem:[#allocation2 + $0xc0] sm:$0xff]
    %v105 = vld [vmem:[#allocation2 + $0xc8] sm:$0xff]
    %v106 = vld [vmem:[#allocation2 + $0xd0] sm:$0xff]
    %v107 = vld [vmem:[#allocation2 + $0xd8] sm:$0xff]
    %v108 = vld [vmem:[#allocation2 + $0xe0] sm:$0xff]
    %v109 = vld [vmem:[#allocation2 + $0xe8] sm:$0xff]
    %v110 = vld [vmem:[#allocation2 + $0xf0] sm:$0xff]
    %v111 = vld [vmem:[#allocation2 + $0xf8] sm:$0xff]
    %v112 = vld [vmem:[#allocation3] sm:$0xf]
    %v113 = vld [vmem:[#allocation3 + $0x4] sm:$0xf]
    %v114 = vld [vmem:[#allocation3 + $0x8] sm:$0xf]
    %v115 = vld [vmem:[#allocation3 + $0xc] sm:$0xf]
    %v116 = vld [vmem:[#allocation3 + $0x10] sm:$0xf]
    %v117 = vld [vmem:[#allocation3 + $0x14] sm:$0xf]
    %v118 = vld [vmem:[#allocation3 + $0x18] sm:$0xf]
    %v119 = vld [vmem:[#allocation3 + $0x1c] sm:$0xf]
    %v120 = vld [vmem:[#allocation3 + $0x20] sm:$0xf]
    %v121 = vld [vmem:[#allocation3 + $0x24] sm:$0xf]
    %v122 = vld [vmem:[#allocation3 + $0x28] sm:$0xf]
    %v123 = vld [vmem:[#allocation3 + $0x2c] sm:$0xf]
    %v124 = vld [vmem:[#allocation3 + $0x30] sm:$0xf]
    %v125 = vld [vmem:[#allocation3 + $0x34] sm:$0xf]
    %v126 = vld [vmem:[#allocation3 + $0x38] sm:$0xf]
    %v127 = vld [vmem:[#allocation3 + $0x3c] sm:$0xf]
    %v128 = vld [vmem:[#allocation3 + $0x40] sm:$0xf]
    %v129 = vld [vmem:[#allocation3 + $0x44] sm:$0xf]
    %v130 = vld [vmem:[#allocation3 + $0x48] sm:$0xf]
    %v131 = vld [vmem:[#allocation3 + $0x4c] sm:$0xf]
    %v132 = vld [vmem:[#allocation3 + $0x50] sm:$0xf]
    %v133 = vld [vmem:[#allocation3 + $0x54] sm:$0xf]
    %v134 = vld [vmem:[#allocation3 + $0x58] sm:$0xf]
    %v135 = vld [vmem:[#allocation3 + $0x5c] sm:$0xf]
    %v136 = vld [vmem:[#allocation3 + $0x60] sm:$0xf]
    %v137 = vld [vmem:[#allocation3 + $0x64] sm:$0xf]
    %v138 = vld [vmem:[#allocation3 + $0x68] sm:$0xf]
    %v139 = vld [vmem:[#allocation3 + $0x6c] sm:$0xf]
    %v140 = vld [vmem:[#allocation3 + $0x70] sm:$0xf]
    %v141 = vld [vmem:[#allocation3 + $0x74] sm:$0xf]
    %v142 = vld [vmem:[#allocation3 + $0x78] sm:$0xf]
    %v143 = vld [vmem:[#allocation3 + $0x7c] sm:$0xf]
    %v144 = vld [vmem:[#allocation6] sm:$0xf]
    %v145 = vld [vmem:[#allocation6 + $0x4] sm:$0xf]
    %v146 = vld [vmem:[#allocation6 + $0x8] sm:$0xf]
    %v147 = vld [vmem:[#allocation6 + $0xc] sm:$0xf]
    %v148 = vld [vmem:[#allocation6 + $0x10] sm:$0xf]
    %v149 = vld [vmem:[#allocation6 + $0x14] sm:$0xf]
    %v150 = vld [vmem:[#allocation6 + $0x18] sm:$0xf]
    %v151 = vld [vmem:[#allocation6 + $0x1c] sm:$0xf]
    %v152 = vld [vmem:[#allocation6 + $0x20] sm:$0xf]
    %v153 = vld [vmem:[#allocation6 + $0x24] sm:$0xf]
    %v154 = vld [vmem:[#allocation6 + $0x28] sm:$0xf]
    %v155 = vld [vmem:[#allocation6 + $0x2c] sm:$0xf]
    %v156 = vld [vmem:[#allocation6 + $0x30] sm:$0xf]
    %v157 = vld [vmem:[#allocation6 + $0x34] sm:$0xf]
    %v158 = vld [vmem:[#allocation6 + $0x38] sm:$0xf]
    %v159 = vld [vmem:[#allocation6 + $0x3c] sm:$0xf]
    %v192 = vunpack.c.l.b16 %v112
    %v193 = vunpack.c.l.b16 %v113
    %v194 = vunpack.c.l.b16 %v114
    %v195 = vunpack.c.l.b16 %v115
    %v196 = vunpack.c.l.b16 %v116
    %v197 = vunpack.c.l.b16 %v117
    %v198 = vunpack.c.l.b16 %v118
    %v199 = vunpack.c.l.b16 %v119
    %v200 = vunpack.c.l.b16 %v120
    %v201 = vunpack.c.l.b16 %v121
    %v202 = vunpack.c.l.b16 %v122
    %v203 = vunpack.c.l.b16 %v123
    %v204 = vunpack.c.l.b16 %v124
    %v205 = vunpack.c.l.b16 %v125
    %v206 = vunpack.c.l.b16 %v126
    %v207 = vunpack.c.l.b16 %v127
    %v208 = vunpack.c.l.b16 %v128
    %v209 = vunpack.c.l.b16 %v129
    %v210 = vunpack.c.l.b16 %v130
    %v211 = vunpack.c.l.b16 %v131
    %v212 = vunpack.c.l.b16 %v132
    %v213 = vunpack.c.l.b16 %v133
    %v214 = vunpack.c.l.b16 %v134
    %v215 = vunpack.c.l.b16 %v135
    %v216 = vunpack.c.l.b16 %v136
    %v217 = vunpack.c.l.b16 %v137
    %v218 = vunpack.c.l.b16 %v138
    %v219 = vunpack.c.l.b16 %v139
    %v220 = vunpack.c.l.b16 %v140
    %v221 = vunpack.c.l.b16 %v141
    %v222 = vunpack.c.l.b16 %v142
    %v223 = vunpack.c.l.b16 %v143
    %v224 = vpack.c.b16 %v193, %v192
    %v225 = vpack.c.b16 %v195, %v194
    %v226 = vpack.c.b16 %v197, %v196
    %v227 = vpack.c.b16 %v199, %v198
    %v228 = vpack.c.b16 %v201, %v200
    %v229 = vpack.c.b16 %v203, %v202
    %v230 = vpack.c.b16 %v205, %v204
    %v231 = vpack.c.b16 %v207, %v206
    %v232 = vpack.c.b16 %v209, %v208
    %v233 = vpack.c.b16 %v211, %v210
    %v234 = vpack.c.b16 %v213, %v212
    %v235 = vpack.c.b16 %v215, %v214
    %v236 = vpack.c.b16 %v217, %v216
    %v237 = vpack.c.b16 %v219, %v218
    %v238 = vpack.c.b16 %v221, %v220
    %v239 = vpack.c.b16 %v223, %v222
    %v272 = vunpack.c.l.b16 %v144
    %v273 = vunpack.c.l.b16 %v145
    %v274 = vunpack.c.l.b16 %v146
    %v275 = vunpack.c.l.b16 %v147
    %v276 = vunpack.c.l.b16 %v148
    %v277 = vunpack.c.l.b16 %v149
    %v278 = vunpack.c.l.b16 %v150
    %v279 = vunpack.c.l.b16 %v151
    %v280 = vunpack.c.l.b16 %v152
    %v281 = vunpack.c.l.b16 %v153
    %v282 = vunpack.c.l.b16 %v154
    %v283 = vunpack.c.l.b16 %v155
    %v284 = vunpack.c.l.b16 %v156
    %v285 = vunpack.c.l.b16 %v157
    %v286 = vunpack.c.l.b16 %v158
    %v287 = vunpack.c.l.b16 %v159
    %v288 = vpack.c.b16 %v273, %v272
    %v289 = vpack.c.b16 %v275, %v274
    %v290 = vpack.c.b16 %v277, %v276
    %v291 = vpack.c.b16 %v279, %v278
    %v292 = vpack.c.b16 %v281, %v280
    %v293 = vpack.c.b16 %v283, %v282
    %v294 = vpack.c.b16 %v285, %v284
    %v295 = vpack.c.b16 %v287, %v286
    %304 = vmatprep.subr.bf16.mxu0 0
    %305 = vmatpush1.bf16.msra.mxu0 %v288
    %306 = vmatprep.subr.bf16.mxu0 0
    %307 = vmatpush1.bf16.msra.mxu0 %v289
    %308 = vmatprep.subr.bf16.mxu0 0
    %309 = vmatpush1.bf16.msra.mxu0 %v290
    %310 = vmatprep.subr.bf16.mxu0 0
    %311 = vmatpush1.bf16.msra.mxu0 %v291
    %312 = vmatprep.subr.bf16.mxu0 0
    %313 = vmatpush1.bf16.msra.mxu0 %v292
    %314 = vmatprep.subr.bf16.mxu0 0
    %315 = vmatpush1.bf16.msra.mxu0 %v293
    %316 = vmatprep.subr.bf16.mxu0 0
    %317 = vmatpush1.bf16.msra.mxu0 %v294
    %318 = vmatprep.subr.bf16.mxu0 0
    %319 = vmatpush1.bf16.msra.mxu0 %v295
    %320 = vmatprep.subr.bf16.mxu0 0
    %321 = vmatpush1.bf16.msra.mxu0 0
    %322 = vmatprep.subr.bf16.mxu0 0
    %323 = vmatpush1.bf16.msra.mxu0 0
    %324 = vmatprep.subr.bf16.mxu0 0
    %325 = vmatpush1.bf16.msra.mxu0 0
    %326 = vmatprep.subr.bf16.mxu0 0
    %327 = vmatpush1.bf16.msra.mxu0 0
    %328 = vmatprep.subr.bf16.mxu0 0
    %329 = vmatpush1.bf16.msra.mxu0 0
    %330 = vmatprep.subr.bf16.mxu0 0
    %331 = vmatpush1.bf16.msra.mxu0 0
    %332 = vmatprep.subr.bf16.mxu0 0
    %333 = vmatpush1.bf16.msra.mxu0 0
    %334 = vmatprep.subr.bf16.mxu0 0
    %335 = vmatpush1.bf16.msra.mxu0 0
    %336 = vmatprep.mubr.bf16.mxu0 0
    %337 = vmatmul.mubr.bf16.gmra.mrb[0].mxu0 %v224
    %v338 = vpop.f32.mrb[0].mxu0
    %v339 = vadd.f32 0.0, %v338
    %v340 = vpop.f32.mrb[0].mxu0
    %v341 = vpop.f32.mrb[0].mxu0
    %v342 = vadd.f32 0.0, %v341
    %v343 = vpop.f32.mrb[0].mxu0
    %344 = vmatprep.mubr.bf16.mxu0 0
    %345 = vmatmul.mubr.bf16.gmra.mrb[0].mxu0 %v225
    %v346 = vpop.f32.mrb[0].mxu0
    %v347 = vadd.f32 0.0, %v346
    %v348 = vpop.f32.mrb[0].mxu0
    %v349 = vpop.f32.mrb[0].mxu0
    %v350 = vadd.f32 0.0, %v349
    %v351 = vpop.f32.mrb[0].mxu0
    %352 = vmatprep.mubr.bf16.mxu0 0
    %353 = vmatmul.mubr.bf16.gmra.mrb[0].mxu0 %v226
    %v354 = vpop.f32.mrb[0].mxu0
    %v355 = vadd.f32 0.0, %v354
    %v356 = vpop.f32.mrb[0].mxu0
    %v357 = vpop.f32.mrb[0].mxu0
    %v358 = vadd.f32 0.0, %v357
    %v359 = vpop.f32.mrb[0].mxu0
    %360 = vmatprep.mubr.bf16.mxu0 0
    %361 = vmatmul.mubr.bf16.gmra.mrb[0].mxu0 %v227
    %v362 = vpop.f32.mrb[0].mxu0
    %v363 = vadd.f32 0.0, %v362
    %v364 = vpop.f32.mrb[0].mxu0
    %v365 = vpop.f32.mrb[0].mxu0
    %v366 = vadd.f32 0.0, %v365
    %v367 = vpop.f32.mrb[0].mxu0
    %368 = vmatprep.mubr.bf16.mxu0 0
    %369 = vmatmul.mubr.bf16.gmra.mrb[0].mxu0 %v228
    %v370 = vpop.f32.mrb[0].mxu0
    %v371 = vadd.f32 0.0, %v370
    %v372 = vpop.f32.mrb[0].mxu0
    %v373 = vpop.f32.mrb[0].mxu0
    %v374 = vadd.f32 0.0, %v373
    %v375 = vpop.f32.mrb[0].mxu0
    %376 = vmatprep.mubr.bf16.mxu0 0
    %377 = vmatmul.mubr.bf16.gmra.mrb[0].mxu0 %v229
    %v378 = vpop.f32.mrb[0].mxu0
    %v379 = vadd.f32 0.0, %v378
    %v380 = vpop.f32.mrb[0].mxu0
    %v381 = vpop.f32.mrb[0].mxu0
    %v382 = vadd.f32 0.0, %v381
    %v383 = vpop.f32.mrb[0].mxu0
    %384 = vmatprep.mubr.bf16.mxu0 0
    %385 = vmatmul.mubr.bf16.gmra.mrb[0].mxu0 %v230
    %v386 = vpop.f32.mrb[0].mxu0
    %v387 = vadd.f32 0.0, %v386
    %v388 = vpop.f32.mrb[0].mxu0
    %v389 = vpop.f32.mrb[0].mxu0
    %v390 = vadd.f32 0.0, %v389
    %v391 = vpop.f32.mrb[0].mxu0
    %392 = vmatprep.mubr.bf16.mxu0 0
    %393 = vmatmul.mubr.bf16.gmra.mrb[0].mxu0 %v231
    %v394 = vpop.f32.mrb[0].mxu0
    %v395 = vadd.f32 0.0, %v394
    %v396 = vpop.f32.mrb[0].mxu0
    %v397 = vpop.f32.mrb[0].mxu0
    %v398 = vadd.f32 0.0, %v397
    %v399 = vpop.f32.mrb[0].mxu0
    %400 = vmatprep.mubr.bf16.mxu0 0
    %401 = vmatmul.mubr.bf16.gmra.mrb[0].mxu0 %v232
    %v402 = vpop.f32.mrb[0].mxu0
    %v403 = vadd.f32 0.0, %v402
    %v404 = vpop.f32.mrb[0].mxu0
    %v405 = vpop.f32.mrb[0].mxu0
    %v406 = vadd.f32 0.0, %v405
    %v407 = vpop.f32.mrb[0].mxu0
    %408 = vmatprep.mubr.bf16.mxu0 0
    %409 = vmatmul.mubr.bf16.gmra.mrb[0].mxu0 %v233
    %v410 = vpop.f32.mrb[0].mxu0
    %v411 = vadd.f32 0.0, %v410
    %v412 = vpop.f32.mrb[0].mxu0
    %v413 = vpop.f32.mrb[0].mxu0
    %v414 = vadd.f32 0.0, %v413
    %v415 = vpop.f32.mrb[0].mxu0
    %416 = vmatprep.mubr.bf16.mxu0 0
    %417 = vmatmul.mubr.bf16.gmra.mrb[0].mxu0 %v234
    %v418 = vpop.f32.mrb[0].mxu0
    %v419 = vadd.f32 0.0, %v418
    %v420 = vpop.f32.mrb[0].mxu0
    %v421 = vpop.f32.mrb[0].mxu0
    %v422 = vadd.f32 0.0, %v421
    %v423 = vpop.f32.mrb[0].mxu0
    %424 = vmatprep.mubr.bf16.mxu0 0
    %425 = vmatmul.mubr.bf16.gmra.mrb[0].mxu0 %v235
    %v426 = vpop.f32.mrb[0].mxu0
    %v427 = vadd.f32 0.0, %v426
    %v428 = vpop.f32.mrb[0].mxu0
    %v429 = vpop.f32.mrb[0].mxu0
    %v430 = vadd.f32 0.0, %v429
    %v431 = vpop.f32.mrb[0].mxu0
    %432 = vmatprep.mubr.bf16.mxu0 0
    %433 = vmatmul.mubr.bf16.gmra.mrb[0].mxu0 %v236
    %v434 = vpop.f32.mrb[0].mxu0
    %v435 = vadd.f32 0.0, %v434
    %v436 = vpop.f32.mrb[0].mxu0
    %v437 = vpop.f32.mrb[0].mxu0
    %v438 = vadd.f32 0.0, %v437
    %v439 = vpop.f32.mrb[0].mxu0
    %440 = vmatprep.mubr.bf16.mxu0 0
    %441 = vmatmul.mubr.bf16.gmra.mrb[0].mxu0 %v237
    %v442 = vpop.f32.mrb[0].mxu0
    %v443 = vadd.f32 0.0, %v442
    %v444 = vpop.f32.mrb[0].mxu0
    %v445 = vpop.f32.mrb[0].mxu0
    %v446 = vadd.f32 0.0, %v445
    %v447 = vpop.f32.mrb[0].mxu0
    %448 = vmatprep.mubr.bf16.mxu0 0
    %449 = vmatmul.mubr.bf16.gmra.mrb[0].mxu0 %v238
    %v450 = vpop.f32.mrb[0].mxu0
    %v451 = vadd.f32 0.0, %v450
    %v452 = vpop.f32.mrb[0].mxu0
    %v453 = vpop.f32.mrb[0].mxu0
    %v454 = vadd.f32 0.0, %v453
    %v455 = vpop.f32.mrb[0].mxu0
    %456 = vmatprep.mubr.bf16.mxu0 0
    %457 = vmatmul.mubr.bf16.gmra.mrb[0].mxu0 %v239
    %v458 = vpop.f32.mrb[0].mxu0
    %v459 = vadd.f32 0.0, %v458
    %v460 = vpop.f32.mrb[0].mxu0
    %v461 = vpop.f32.mrb[0].mxu0
    %v462 = vadd.f32 0.0, %v461
    %v463 = vpop.f32.mrb[0].mxu0
    %464 = vdwg.mxu0
    %v465 = vadd.f32 %v80, %v339
    %v466 = vadd.f32 %v81, %v342
    %v467 = vadd.f32 %v82, %v347
    %v468 = vadd.f32 %v83, %v350
    %v469 = vadd.f32 %v84, %v355
    %v470 = vadd.f32 %v85, %v358
    %v471 = vadd.f32 %v86, %v363
    %v472 = vadd.f32 %v87, %v366
    %v473 = vadd.f32 %v88, %v371
    %v474 = vadd.f32 %v89, %v374
    %v475 = vadd.f32 %v90, %v379
    %v476 = vadd.f32 %v91, %v382
    %v477 = vadd.f32 %v92, %v387
    %v478 = vadd.f32 %v93, %v390
    %v479 = vadd.f32 %v94, %v395
    %v480 = vadd.f32 %v95, %v398
    %v481 = vadd.f32 %v96, %v403
    %v482 = vadd.f32 %v97, %v406
    %v483 = vadd.f32 %v98, %v411
    %v484 = vadd.f32 %v99, %v414
    %v485 = vadd.f32 %v100, %v419
    %v486 = vadd.f32 %v101, %v422
    %v487 = vadd.f32 %v102, %v427
    %v488 = vadd.f32 %v103, %v430
    %v489 = vadd.f32 %v104, %v435
    %v490 = vadd.f32 %v105, %v438
    %v491 = vadd.f32 %v106, %v443
    %v492 = vadd.f32 %v107, %v446
    %v493 = vadd.f32 %v108, %v451
    %v494 = vadd.f32 %v109, %v454
    %v495 = vadd.f32 %v110, %v459
    %v496 = vadd.f32 %v111, %v462
    %497 = vst [vmem:[#allocation2] sm:$0xff] %v465
    %498 = vst [vmem:[#allocation2 + $0x8] sm:$0xff] %v466
    %499 = vst [vmem:[#allocation2 + $0x10] sm:$0xff] %v467
    %500 = vst [vmem:[#allocation2 + $0x18] sm:$0xff] %v468
    %501 = vst [vmem:[#allocation2 + $0x20] sm:$0xff] %v469
    %502 = vst [vmem:[#allocation2 + $0x28] sm:$0xff] %v470
    %503 = vst [vmem:[#allocation2 + $0x30] sm:$0xff] %v471
    %504 = vst [vmem:[#allocation2 + $0x38] sm:$0xff] %v472
    %505 = vst [vmem:[#allocation2 + $0x40] sm:$0xff] %v473
    %506 = vst [vmem:[#allocation2 + $0x48] sm:$0xff] %v474
    %507 = vst [vmem:[#allocation2 + $0x50] sm:$0xff] %v475
    %508 = vst [vmem:[#allocation2 + $0x58] sm:$0xff] %v476
    %509 = vst [vmem:[#allocation2 + $0x60] sm:$0xff] %v477
    %510 = vst [vmem:[#allocation2 + $0x68] sm:$0xff] %v478
    %511 = vst [vmem:[#allocation2 + $0x70] sm:$0xff] %v479
    %512 = vst [vmem:[#allocation2 + $0x78] sm:$0xff] %v480
    %513 = vst [vmem:[#allocation2 + $0x80] sm:$0xff] %v481
    %514 = vst [vmem:[#allocation2 + $0x88] sm:$0xff] %v482
    %515 = vst [vmem:[#allocation2 + $0x90] sm:$0xff] %v483
    %516 = vst [vmem:[#allocation2 + $0x98] sm:$0xff] %v484
    %517 = vst [vmem:[#allocation2 + $0xa0] sm:$0xff] %v485
    %518 = vst [vmem:[#allocation2 + $0xa8] sm:$0xff] %v486
    %519 = vst [vmem:[#allocation2 + $0xb0] sm:$0xff] %v487
    %520 = vst [vmem:[#allocation2 + $0xb8] sm:$0xff] %v488
    %521 = vst [vmem:[#allocation2 + $0xc0] sm:$0xff] %v489
    %522 = vst [vmem:[#allocation2 + $0xc8] sm:$0xff] %v490
    %523 = vst [vmem:[#allocation2 + $0xd0] sm:$0xff] %v491
    %524 = vst [vmem:[#allocation2 + $0xd8] sm:$0xff] %v492
    %525 = vst [vmem:[#allocation2 + $0xe0] sm:$0xff] %v493
    %526 = vst [vmem:[#allocation2 + $0xe8] sm:$0xff] %v494
    %527 = vst [vmem:[#allocation2 + $0xf0] sm:$0xff] %v495
    %528 = vst [vmem:[#allocation2 + $0xf8] sm:$0xff] %v496
    // Predicated region
    $region26: #{tpu_custom_call.1} parent=1 // pred_check
      %p529 = pneg %p44
    $region27: #{tpu_custom_call.1} parent=1 // pred_check_branch
      %531 = sbr.rel (%p529) target = $region29
    $region28: #{tpu_custom_call.1} parent=1 // pred_region
      %v532 = vld [vmem:[#allocation2] sm:$0xff]
      %v533 = vld [vmem:[#allocation2 + $0x8] sm:$0xff]
      %v534 = vld [vmem:[#allocation2 + $0x10] sm:$0xff]
      %v535 = vld [vmem:[#allocation2 + $0x18] sm:$0xff]
      %v536 = vld [vmem:[#allocation2 + $0x20] sm:$0xff]
      %v537 = vld [vmem:[#allocation2 + $0x28] sm:$0xff]
      %v538 = vld [vmem:[#allocation2 + $0x30] sm:$0xff]
      %v539 = vld [vmem:[#allocation2 + $0x38] sm:$0xff]
      %v540 = vld [vmem:[#allocation2 + $0x40] sm:$0xff]
      %v541 = vld [vmem:[#allocation2 + $0x48] sm:$0xff]
      %v542 = vld [vmem:[#allocation2 + $0x50] sm:$0xff]
      %v543 = vld [vmem:[#allocation2 + $0x58] sm:$0xff]
      %v544 = vld [vmem:[#allocation2 + $0x60] sm:$0xff]
      %v545 = vld [vmem:[#allocation2 + $0x68] sm:$0xff]
      %v546 = vld [vmem:[#allocation2 + $0x70] sm:$0xff]
      %v547 = vld [vmem:[#allocation2 + $0x78] sm:$0xff]
      %v548 = vld [vmem:[#allocation2 + $0x80] sm:$0xff]
      %v549 = vld [vmem:[#allocation2 + $0x88] sm:$0xff]
      %v550 = vld [vmem:[#allocation2 + $0x90] sm:$0xff]
      %v551 = vld [vmem:[#allocation2 + $0x98] sm:$0xff]
      %v552 = vld [vmem:[#allocation2 + $0xa0] sm:$0xff]
      %v553 = vld [vmem:[#allocation2 + $0xa8] sm:$0xff]
      %v554 = vld [vmem:[#allocation2 + $0xb0] sm:$0xff]
      %v555 = vld [vmem:[#allocation2 + $0xb8] sm:$0xff]
      %v556 = vld [vmem:[#allocation2 + $0xc0] sm:$0xff]
      %v557 = vld [vmem:[#allocation2 + $0xc8] sm:$0xff]
      %v558 = vld [vmem:[#allocation2 + $0xd0] sm:$0xff]
      %v559 = vld [vmem:[#allocation2 + $0xd8] sm:$0xff]
      %v560 = vld [vmem:[#allocation2 + $0xe0] sm:$0xff]
      %v561 = vld [vmem:[#allocation2 + $0xe8] sm:$0xff]
      %v562 = vld [vmem:[#allocation2 + $0xf0] sm:$0xff]
      %v563 = vld [vmem:[#allocation2 + $0xf8] sm:$0xff]
      %v564 = vld [vmem:[%s2] sm:$0x1]
      %v566 = vlaneseq
      %v567 = vshrl.u32 %v566, 7
      %v568 = vsub.s32 0, %v567
      %v569 = vrot.slane %v564, %v568
      %v571 = vadd.f32 %v532, %v569
      %v572 = vadd.f32 %v533, %v569
      %v573 = vadd.f32 %v534, %v569
      %v574 = vadd.f32 %v535, %v569
      %v575 = vadd.f32 %v536, %v569
      %v576 = vadd.f32 %v537, %v569
      %v577 = vadd.f32 %v538, %v569
      %v578 = vadd.f32 %v539, %v569
      %v579 = vadd.f32 %v540, %v569
      %v580 = vadd.f32 %v541, %v569
      %v581 = vadd.f32 %v542, %v569
      %v582 = vadd.f32 %v543, %v569
      %v583 = vadd.f32 %v544, %v569
      %v584 = vadd.f32 %v545, %v569
      %v585 = vadd.f32 %v546, %v569
      %v586 = vadd.f32 %v547, %v569
      %v587 = vadd.f32 %v548, %v569
      %v588 = vadd.f32 %v549, %v569
      %v589 = vadd.f32 %v550, %v569
      %v590 = vadd.f32 %v551, %v569
      %v591 = vadd.f32 %v552, %v569
      %v592 = vadd.f32 %v553, %v569
      %v593 = vadd.f32 %v554, %v569
      %v594 = vadd.f32 %v555, %v569
      %v595 = vadd.f32 %v556, %v569
      %v596 = vadd.f32 %v557, %v569
      %v597 = vadd.f32 %v558, %v569
      %v598 = vadd.f32 %v559, %v569
      %v599 = vadd.f32 %v560, %v569
      %v600 = vadd.f32 %v561, %v569
      %v601 = vadd.f32 %v562, %v569
      %v602 = vadd.f32 %v563, %v569
      %v603 = vmax.f32 %v571, 0.0
      %v604 = vmax.f32 %v572, 0.0
      %v605 = vmax.f32 %v573, 0.0
      %v606 = vmax.f32 %v574, 0.0
      %v607 = vmax.f32 %v575, 0.0
      %v608 = vmax.f32 %v576, 0.0
      %v609 = vmax.f32 %v577, 0.0
      %v610 = vmax.f32 %v578, 0.0
      %v611 = vmax.f32 %v579, 0.0
      %v612 = vmax.f32 %v580, 0.0
      %v613 = vmax.f32 %v581, 0.0
      %v614 = vmax.f32 %v582, 0.0
      %v615 = vmax.f32 %v583, 0.0
      %v616 = vmax.f32 %v584, 0.0
      %v617 = vmax.f32 %v585, 0.0
      %v618 = vmax.f32 %v586, 0.0
      %v619 = vmax.f32 %v587, 0.0
      %v620 = vmax.f32 %v588, 0.0
      %v621 = vmax.f32 %v589, 0.0
      %v622 = vmax.f32 %v590, 0.0
      %v623 = vmax.f32 %v591, 0.0
      %v624 = vmax.f32 %v592, 0.0
      %v625 = vmax.f32 %v593, 0.0
      %v626 = vmax.f32 %v594, 0.0
      %v627 = vmax.f32 %v595, 0.0
      %v628 = vmax.f32 %v596, 0.0
      %v629 = vmax.f32 %v597, 0.0
      %v630 = vmax.f32 %v598, 0.0
      %v631 = vmax.f32 %v599, 0.0
      %v632 = vmax.f32 %v600, 0.0
      %v633 = vmax.f32 %v601, 0.0
      %v634 = vmax.f32 %v602, 0.0
      %635 = vst [vmem:[#allocation8] sm:$0xff] %v603
      %636 = vst [vmem:[#allocation8 + $0x8] sm:$0xff] %v604
      %637 = vst [vmem:[#allocation8 + $0x10] sm:$0xff] %v605
      %638 = vst [vmem:[#allocation8 + $0x18] sm:$0xff] %v606
      %639 = vst [vmem:[#allocation8 + $0x20] sm:$0xff] %v607
      %640 = vst [vmem:[#allocation8 + $0x28] sm:$0xff] %v608
      %641 = vst [vmem:[#allocation8 + $0x30] sm:$0xff] %v609
      %642 = vst [vmem:[#allocation8 + $0x38] sm:$0xff] %v610
      %643 = vst [vmem:[#allocation8 + $0x40] sm:$0xff] %v611
      %644 = vst [vmem:[#allocation8 + $0x48] sm:$0xff] %v612
      %645 = vst [vmem:[#allocation8 + $0x50] sm:$0xff] %v613
      %646 = vst [vmem:[#allocation8 + $0x58] sm:$0xff] %v614
      %647 = vst [vmem:[#allocation8 + $0x60] sm:$0xff] %v615
      %648 = vst [vmem:[#allocation8 + $0x68] sm:$0xff] %v616
      %649 = vst [vmem:[#allocation8 + $0x70] sm:$0xff] %v617
      %650 = vst [vmem:[#allocation8 + $0x78] sm:$0xff] %v618
      %651 = vst [vmem:[#allocation8 + $0x80] sm:$0xff] %v619
      %652 = vst [vmem:[#allocation8 + $0x88] sm:$0xff] %v620
      %653 = vst [vmem:[#allocation8 + $0x90] sm:$0xff] %v621
      %654 = vst [vmem:[#allocation8 + $0x98] sm:$0xff] %v622
      %655 = vst [vmem:[#allocation8 + $0xa0] sm:$0xff] %v623
      %656 = vst [vmem:[#allocation8 + $0xa8] sm:$0xff] %v624
      %657 = vst [vmem:[#allocation8 + $0xb0] sm:$0xff] %v625
      %658 = vst [vmem:[#allocation8 + $0xb8] sm:$0xff] %v626
      %659 = vst [vmem:[#allocation8 + $0xc0] sm:$0xff] %v627
      %660 = vst [vmem:[#allocation8 + $0xc8] sm:$0xff] %v628
      %661 = vst [vmem:[#allocation8 + $0xd0] sm:$0xff] %v629
      %662 = vst [vmem:[#allocation8 + $0xd8] sm:$0xff] %v630
      %663 = vst [vmem:[#allocation8 + $0xe0] sm:$0xff] %v631
      %664 = vst [vmem:[#allocation8 + $0xe8] sm:$0xff] %v632
      %665 = vst [vmem:[#allocation8 + $0xf0] sm:$0xff] %v633
      %666 = vst [vmem:[#allocation8 + $0xf8] sm:$0xff] %v634
    $region29: #{tpu_custom_call.1} parent=1 // pred_fallthru
      _
    // Predicated region
    $region30: #{tpu_custom_call.1} parent=1 // pred_check
      _
    $region31: #{tpu_custom_call.1} parent=1 // pred_check_branch
      %668 = sbr.rel (0) target = $region33
    $region32: #{tpu_custom_call.1} parent=1 // pred_region
      %s670 = ssub.s32 4096, 4096
      %671 = vsyncadd [#allocation5], %s670
      %s672 = sshll.u32 [#allocation8], 4
      %s673 = int_to_ptr.vmem [resolvable:$true] %s672
      %678 = dma.vmem_to_hbm [thread:$0]  %s673, 4096, %s3, [#allocation5], 128, 128, 8
    $region33: #{tpu_custom_call.1} parent=1 // pred_fallthru
      _
    // Predicated region
    $region34: #{tpu_custom_call.1} parent=1 // pred_check
      _
    $region35: #{tpu_custom_call.1} parent=1 // pred_check_branch
      %680 = sbr.rel (0) target = $region37
    $region36: #{tpu_custom_call.1} parent=1 // pred_region
      %681 = dma.done [#allocation5], 4096
    $region37: #{tpu_custom_call.1} parent=1 // pred_fallthru
      _
    %682 = vsyncpa [#allocation4], 1
    %683 = vsyncpa [#allocation7], 1
    %684 = vsyncpa [#allocation5], 1

</llo_original>
